<compile_context>
chip_gen: v7x
topology: tpu7x:2x2x1
jax: 0.10.0
libtpu: 0.0.40
codegen_flags: <defaults>
</compile_context>

<pallas_src>
import math

import jax
import jax.numpy as jnp
from jax.experimental import pallas as pl
from jax.experimental.pallas import tpu as pltpu

NEG_SLOPE = 0.01  # PyTorch nn.LeakyReLU() default


def _round_up(x, m):
    return (x + m - 1) // m * m


def _gemm_bias_lrelu_kernel(p_ref, w_ref, b_ref, o_ref):
    # p_ref: (tm, 9C) im2col patch rows      w_ref: (9C, C) folded conv weight
    # b_ref: (1, C) bias                      o_ref: (tm, C) output rows
    acc = jnp.dot(
        p_ref[...],
        w_ref[...],
        preferred_element_type=jnp.float32,
        precision=jax.lax.Precision.HIGHEST,
    )
    acc = acc + b_ref[...].astype(jnp.float32)
    y = jnp.where(acc > 0, acc, NEG_SLOPE * acc)  # LeakyReLU in f32, cast once on store
    o_ref[...] = y.astype(o_ref.dtype)


@jax.jit
def downsampling(x_nchw, weight_oihw, bias):
    """Conv2d(C, C, 3, stride=2, padding=1) + LeakyReLU, matching PyTorch NCHW."""
    B, C, H, W = x_nchw.shape
    Ho = (H + 2 - 3) // 2 + 1
    Wo = (W + 2 - 3) // 2 + 1
    K = 9 * C

    # ---- layout glue (module API is NCHW) ------------------------------------
    x = jnp.transpose(x_nchw, (0, 2, 3, 1))                 # NHWC: C on lanes
    xp = jnp.pad(x, ((0, 0), (1, 1), (1, 1), (0, 0)))       # zero pad = 1

    # im2col for the 3x3 / stride-2 conv: each tap is one contiguous strided
    # slice, concatenated on the channel (lane) axis -> (B, Ho, Wo, 9*C).
    taps = []
    for kh in range(3):
        for kw in range(3):
            taps.append(
                jax.lax.slice(
                    xp,
                    (0, kh, kw, 0),
                    (B, kh + 2 * Ho - 1, kw + 2 * Wo - 1, C),
                    (1, 2, 2, 1),
                )
            )
    patches = jnp.concatenate(taps, axis=-1).reshape(B * Ho * Wo, K)

    # Conv weight (O, I, kh, kw) -> (kh, kw, I, O) -> (9*Cin, Cout); same
    # (kh, kw, cin) ordering as the patch channels above.
    w = jnp.transpose(weight_oihw, (2, 3, 1, 0)).reshape(K, C)
    b = bias.reshape(1, C)

    # ---- tiled GEMM over M = B*Ho*Wo output pixels ---------------------------
    M = B * Ho * Wo
    tm = min(256, _round_up(M, 8))        # multiple of 8 sublanes, capped for VMEM/vregs
    Mp = _round_up(M, tm)
    if Mp != M:
        patches = jnp.pad(patches, ((0, Mp - M), (0, 0)))

    out_flat = pl.pallas_call(
        _gemm_bias_lrelu_kernel,
        out_shape=jax.ShapeDtypeStruct((Mp, C), x_nchw.dtype),
        grid=(Mp // tm,),
        in_specs=[
            pl.BlockSpec((tm, K), lambda i: (i, 0)),   # patch row-strip
            pl.BlockSpec((K, C), lambda i: (0, 0)),    # weight, resident
            pl.BlockSpec((1, C), lambda i: (0, 0)),    # bias, resident
        ],
        out_specs=pl.BlockSpec((tm, C), lambda i: (i, 0)),
        compiler_params=pltpu.CompilerParams(dimension_semantics=("parallel",)),
    )(patches, w, b)

    out = out_flat[:M].reshape(B, Ho, Wo, C)
    return jnp.transpose(out, (0, 3, 1, 2))             # back to NCHW


def _reference(x_nchw, weight_oihw, bias):
    y = jax.lax.conv_general_dilated(
        x_nchw, weight_oihw,
        window_strides=(2, 2),
        padding=((1, 1), (1, 1)),
        dimension_numbers=("NCHW", "OIHW", "NCHW"),
        precision=jax.lax.Precision.HIGHEST,
    )
    y = y + bias.reshape(1, -1, 1, 1)
    return jnp.where(y > 0, y, NEG_SLOPE * y)


if __name__ == "__main__":
    B, C, H, W = 2, 4, 16, 16

    key = jax.random.PRNGKey(0)
    kw_, kb_, kx_ = jax.random.split(key, 3)

    # Deterministic init mimicking PyTorch Conv2d default (uniform +/- 1/sqrt(fan_in))
    fan_in = C * 3 * 3
    bound = 1.0 / math.sqrt(fan_in)
    weight = jax.random.uniform(kw_, (C, C, 3, 3), jnp.float32, -bound, bound)
    bias = jax.random.uniform(kb_, (C,), jnp.float32, -bound, bound)
    x = jax.random.normal(kx_, (B, C, H, W), jnp.float32)

    out = jax.block_until_ready(downsampling(x, weight, bias))
    assert out.shape == (B, C, H // 2, W // 2), out.shape

    ref = jax.block_until_ready(_reference(x, weight, bias))
    assert jnp.allclose(out, ref, atol=1e-4, rtol=1e-4), float(jnp.max(jnp.abs(out - ref)))

    print("KERNEL_OK")
</pallas_src>

<mosaic_0001>
module attributes {stable_mosaic.version = 11 : i64} {
  func.func @_gemm_bias_lrelu_kernel(%arg0: i32, %arg1: memref<128x36xf32, #tpu.memory_space<vmem>>, %arg2: memref<36x4xf32, #tpu.memory_space<vmem>>, %arg3: memref<1x4xf32, #tpu.memory_space<vmem>>, %arg4: memref<128x4xf32, #tpu.memory_space<vmem>>) attributes {dimension_semantics = [#tpu.dimension_semantics<parallel>], iteration_bounds = array<i64: 1>, scalar_prefetch = 0 : i64, scratch_operands = 0 : i64, tpu.core_type = #tpu.core_type<tc>, window_params = [{transform_indices = @transform_0, window_bounds = array<i64: 128, 36>}, {pipeline_mode = #tpu.pipeline_mode<synchronous>, transform_indices = @transform_1, window_bounds = array<i64: 36, 4>}, {pipeline_mode = #tpu.pipeline_mode<synchronous>, transform_indices = @transform_2, window_bounds = array<i64: 1, 4>}, {transform_indices = @transform_3, window_bounds = array<i64: 128, 4>}]} {
    %c0 = arith.constant 0 : index
    %c0_0 = arith.constant 0 : index
    %0 = vector.load %arg1[%c0, %c0_0] : memref<128x36xf32, #tpu.memory_space<vmem>>, vector<128x36xf32>
    %c0_1 = arith.constant 0 : index
    %c0_2 = arith.constant 0 : index
    %1 = vector.load %arg2[%c0_1, %c0_2] : memref<36x4xf32, #tpu.memory_space<vmem>>, vector<36x4xf32>
    %cst = arith.constant dense<0.000000e+00> : vector<128x4xf32>
    %2 = tpu.matmul %0, %1, %cst {dimension_numbers = #tpu.dot_dimension_numbers<[1], [0], [0], [1], [0, 0, 1, 1], [], []>, precision = #tpu.contract_precision<fp32>} : vector<128x36xf32>, vector<36x4xf32>, vector<128x4xf32> -> vector<128x4xf32>
    %c0_3 = arith.constant 0 : index
    %c0_4 = arith.constant 0 : index
    %3 = vector.load %arg3[%c0_3, %c0_4] : memref<1x4xf32, #tpu.memory_space<vmem>>, vector<1x4xf32>
    %4 = vector.broadcast %3 : vector<1x4xf32> to vector<128x4xf32>
    %5 = arith.addf %2, %4 : vector<128x4xf32>
    %cst_5 = arith.constant 0.000000e+00 : f32
    %6 = vector.broadcast %cst_5 : f32 to vector<128x4xf32>
    %7 = arith.cmpf ogt, %5, %6 : vector<128x4xf32>
    %cst_6 = arith.constant 0.00999999977 : f32
    %8 = vector.broadcast %cst_6 : f32 to vector<128x4xf32>
    %9 = arith.mulf %8, %5 : vector<128x4xf32>
    %10 = arith.select %7, %5, %9 : vector<128x4xi1>, vector<128x4xf32>
    %c0_7 = arith.constant 0 : index
    %c0_8 = arith.constant 0 : index
    %11 = vector.load %arg4[%c0_7, %c0_8] : memref<128x4xf32, #tpu.memory_space<vmem>>, vector<128x4xf32>
    tpu.vector_store %arg4[%c0_7, %c0_8], %10 {strides = array<i32>} : memref<128x4xf32, #tpu.memory_space<vmem>>, vector<128x4xf32>,
    return
  }
  func.func @transform_0(%arg0: i32) -> (i32, i32) {
    %c0_i32 = arith.constant 0 : i32
    %c0_i32_0 = arith.constant 0 : i32
    return %arg0, %c0_i32 : i32, i32
  }
  func.func @transform_1(%arg0: i32) -> (i32, i32) {
    %c0_i32 = arith.constant 0 : i32
    %c0_i32_0 = arith.constant 0 : i32
    %c0_i32_1 = arith.constant 0 : i32
    return %c0_i32, %c0_i32_0 : i32, i32
  }
  func.func @transform_2(%arg0: i32) -> (i32, i32) {
    %c0_i32 = arith.constant 0 : i32
    %c0_i32_0 = arith.constant 0 : i32
    %c0_i32_1 = arith.constant 0 : i32
    return %c0_i32, %c0_i32_0 : i32, i32
  }
  func.func @transform_3(%arg0: i32) -> (i32, i32) {
    %c0_i32 = arith.constant 0 : i32
    %c0_i32_0 = arith.constant 0 : i32
    return %arg0, %c0_i32 : i32, i32
  }
}

</mosaic_0001>

<llo_original>
// kernel: downsampling.1
$region0: #{downsampling.1}
  #allocation0 [shape = 'u32[]', space=smem, size = 0x4, offset = 0x4, fixed_abs, tag = 'smem constant byte address 0x4 - core index']
  #allocation1 [shape = 'u32[144,128]{1,0:T(1,128)}', space=vmem, size = 0x12000, scoped, tag = 'internal scratch']
  %s0 = inlined_call_operand.vmem [shape: f32[128,36], index: 0, kind: input, shape index: {}]
  %s1 = inlined_call_operand.vmem [shape: f32[36,4], index: 1, kind: input, shape index: {}]
  %s2 = inlined_call_operand.vmem [shape: f32[1,4], index: 2, kind: input, shape index: {}]
  %s3 = inlined_call_operand.vmem [shape: f32[128,4], index: 3, kind: output, shape index: {}]
  %s4 = sld [smem:[#allocation0]]
  $region22: #{downsampling.1} parent=0
    _
  %s6 = ssub.s32 1, %s4
  %s7 = scalar_select 0, %s6, %s4
  // Predicated region
  $region2: #{downsampling.1} parent=0 // pred_check
    _
  $region3: #{downsampling.1} parent=0 // pred_check_branch
    %9 = sbr.rel (0) target = $region5
  $region4: #{downsampling.1} parent=0 // pred_region
    _
  $region5: #{downsampling.1} parent=0 // pred_fallthru
    _
  // Predicated region
  $region6: #{downsampling.1} parent=0 // pred_check
    _
  $region7: #{downsampling.1} parent=0 // pred_check_branch
    %11 = sbr.rel (0) target = $region9
  $region8: #{downsampling.1} parent=0 // pred_region
    _
  $region9: #{downsampling.1} parent=0 // pred_fallthru
    _
  // Predicated region
  $region10: #{downsampling.1} parent=0 // pred_check
    _
  $region11: #{downsampling.1} parent=0 // pred_check_branch
    %13 = sbr.rel (0) target = $region13
  $region12: #{downsampling.1} parent=0 // pred_region
    _
  $region13: #{downsampling.1} parent=0 // pred_fallthru
    _
  %v14 = vld [vmem:[%s0] sm:$0xff]
  %v15 = vld [vmem:[%s0 + $0x8] sm:$0xff]
  %v16 = vld [vmem:[%s0 + $0x10] sm:$0xff]
  %v17 = vld [vmem:[%s0 + $0x18] sm:$0xff]
  %v18 = vld [vmem:[%s0 + $0x20] sm:$0xff]
  %v19 = vld [vmem:[%s0 + $0x28] sm:$0xff]
  %v20 = vld [vmem:[%s0 + $0x30] sm:$0xff]
  %v21 = vld [vmem:[%s0 + $0x38] sm:$0xff]
  %v22 = vld [vmem:[%s0 + $0x40] sm:$0xff]
  %v23 = vld [vmem:[%s0 + $0x48] sm:$0xff]
  %v24 = vld [vmem:[%s0 + $0x50] sm:$0xff]
  %v25 = vld [vmem:[%s0 + $0x58] sm:$0xff]
  %v26 = vld [vmem:[%s0 + $0x60] sm:$0xff]
  %v27 = vld [vmem:[%s0 + $0x68] sm:$0xff]
  %v28 = vld [vmem:[%s0 + $0x70] sm:$0xff]
  %v29 = vld [vmem:[%s0 + $0x78] sm:$0xff]
  %v30 = vld [vmem:[%s1] sm:$0xff]
  %v31 = vld [vmem:[%s1 + $0x8] sm:$0xff]
  %v32 = vld [vmem:[%s1 + $0x10] sm:$0xff]
  %v33 = vld [vmem:[%s1 + $0x18] sm:$0xff]
  %v34 = vld [vmem:[%s1 + $0x20] sm:$0xf]
  %v35 = vld [vmem:[%s2] sm:$0x1]
  %v37 = vlaneseq
  %v38 = vshrl.u32 %v37, 7
  %v39 = vsub.s32 0, %v38
  %v40 = vrot.slane %v35, %v39
  %vm42 = vcmask 293888
  %v44 = vsel %vm42, %v14, 0
  %v47 = vsel %vm42, %v15, 0
  %v50 = vsel %vm42, %v16, 0
  %v53 = vsel %vm42, %v17, 0
  %v56 = vsel %vm42, %v18, 0
  %v59 = vsel %vm42, %v19, 0
  %v62 = vsel %vm42, %v20, 0
  %v65 = vsel %vm42, %v21, 0
  %v68 = vsel %vm42, %v22, 0
  %v71 = vsel %vm42, %v23, 0
  %v74 = vsel %vm42, %v24, 0
  %v77 = vsel %vm42, %v25, 0
  %v80 = vsel %vm42, %v26, 0
  %v83 = vsel %vm42, %v27, 0
  %v86 = vsel %vm42, %v28, 0
  %v89 = vsel %vm42, %v29, 0
  %vm91 = vcmask 1043456
  %v93 = vsel %vm91, %v34, 0
  %95 = vmatprep.subr.mxu0 0.0
  %v96 = vand.u32 %v30, 4294901760
  %97 = vmatpush1.msra.mxu0 %v96
  %98 = vmatprep.subr.mxu0 0.0
  %v99 = vand.u32 %v31, 4294901760
  %100 = vmatpush1.msra.mxu0 %v99
  %101 = vmatprep.subr.mxu0 0.0
  %v102 = vand.u32 %v32, 4294901760
  %103 = vmatpush1.msra.mxu0 %v102
  %104 = vmatprep.subr.mxu0 0.0
  %v105 = vand.u32 %v33, 4294901760
  %106 = vmatpush1.msra.mxu0 %v105
  %107 = vmatprep.subr.mxu0 0.0
  %v108 = vand.u32 %v93, 4294901760
  %109 = vmatpush1.msra.mxu0 %v108
  %110 = vmatprep.subr.mxu0 0.0
  %111 = vmatpush1.msra.mxu0 0.0
  %112 = vmatprep.subr.mxu0 0.0
  %113 = vmatpush1.msra.mxu0 0.0
  %114 = vmatprep.subr.mxu0 0.0
  %115 = vmatpush1.msra.mxu0 0.0
  %116 = vmatprep.subr.mxu0 0.0
  %117 = vmatpush1.msra.mxu0 0.0
  %118 = vmatprep.subr.mxu0 0.0
  %119 = vmatpush1.msra.mxu0 0.0
  %120 = vmatprep.subr.mxu0 0.0
  %121 = vmatpush1.msra.mxu0 0.0
  %122 = vmatprep.subr.mxu0 0.0
  %123 = vmatpush1.msra.mxu0 0.0
  %124 = vmatprep.subr.mxu0 0.0
  %125 = vmatpush1.msra.mxu0 0.0
  %126 = vmatprep.subr.mxu0 0.0
  %127 = vmatpush1.msra.mxu0 0.0
  %128 = vmatprep.subr.mxu0 0.0
  %129 = vmatpush1.msra.mxu0 0.0
  %130 = vmatprep.subr.mxu0 0.0
  %131 = vmatpush1.msra.mxu0 0.0
  %132 = vmatprep.subr.mxu0 0.0
  %133 = vmatpush1.msra.mxu0 0.0
  %134 = vmatprep.subr.mxu0 0.0
  %135 = vmatpush1.msra.mxu0 0.0
  %136 = vmatprep.subr.mxu0 0.0
  %137 = vmatpush1.msra.mxu0 0.0
  %138 = vmatprep.subr.mxu0 0.0
  %139 = vmatpush1.msra.mxu0 0.0
  %140 = vmatprep.subr.mxu0 0.0
  %141 = vmatpush1.msra.mxu0 0.0
  %142 = vmatprep.subr.mxu0 0.0
  %143 = vmatpush1.msra.mxu0 0.0
  %144 = vmatprep.subr.mxu0 0.0
  %145 = vmatpush1.msra.mxu0 0.0
  %146 = vmatprep.subr.mxu0 0.0
  %147 = vmatpush1.msra.mxu0 0.0
  %148 = vmatprep.subr.mxu0 0.0
  %149 = vmatpush1.msra.mxu0 0.0
  %150 = vmatprep.subr.mxu0 0.0
  %151 = vmatpush1.msra.mxu0 0.0
  %152 = vmatprep.subr.mxu0 0.0
  %153 = vmatpush1.msra.mxu0 0.0
  %154 = vmatprep.subr.mxu0 0.0
  %155 = vmatpush1.msra.mxu0 0.0
  %156 = vmatprep.subr.mxu0 0.0
  %157 = vmatpush1.msra.mxu0 0.0
  %158 = vmatprep.subr.mxu0 0.0
  %159 = vmatpush1.msra.mxu0 0.0
  %160 = vmatprep.subr.mxu0 0.0
  %161 = vmatpush1.msra.mxu0 0.0
  %162 = vmatprep.subr.mxu0 0.0
  %163 = vmatpush1.msra.mxu0 0.0
  %164 = vmatprep.mubr.f32.mxu0 0.0
  %v165 = vand.u32 %v44, 4294901760
  %v166 = vsub.f32 %v44, %v165
  %v167 = vand.u32 %v166, 4294901760
  %v168 = vsub.f32 %v166, %v167
  %v169 = vand.u32 %v168, 4294901760
  %170 = vmatmul.mubr.f32.gmra.mrb[0].mxu0 %v169
  %v171 = vpop.f32.mrb[0].mxu0
  %v172 = vadd.f32 %v40, %v171
  %v173 = vpop.f32.mrb[0].mxu0
  %174 = vmatprep.mubr.f32.mxu0 0.0
  %v175 = vand.u32 %v47, 4294901760
  %v176 = vsub.f32 %v47, %v175
  %v177 = vand.u32 %v176, 4294901760
  %v178 = vsub.f32 %v176, %v177
  %v179 = vand.u32 %v178, 4294901760
  %180 = vmatmul.mubr.f32.gmra.mrb[0].mxu0 %v179
  %v181 = vpop.f32.mrb[0].mxu0
  %v182 = vadd.f32 %v40, %v181
  %v183 = vpop.f32.mrb[0].mxu0
  %184 = vmatprep.mubr.f32.mxu0 0.0
  %v185 = vand.u32 %v50, 4294901760
  %v186 = vsub.f32 %v50, %v185
  %v187 = vand.u32 %v186, 4294901760
  %v188 = vsub.f32 %v186, %v187
  %v189 = vand.u32 %v188, 4294901760
  %190 = vmatmul.mubr.f32.gmra.mrb[0].mxu0 %v189
  %v191 = vpop.f32.mrb[0].mxu0
  %v192 = vadd.f32 %v40, %v191
  %v193 = vpop.f32.mrb[0].mxu0
  %194 = vmatprep.mubr.f32.mxu0 0.0
  %v195 = vand.u32 %v53, 4294901760
  %v196 = vsub.f32 %v53, %v195
  %v197 = vand.u32 %v196, 4294901760
  %v198 = vsub.f32 %v196, %v197
  %v199 = vand.u32 %v198, 4294901760
  %200 = vmatmul.mubr.f32.gmra.mrb[0].mxu0 %v199
  %v201 = vpop.f32.mrb[0].mxu0
  %v202 = vadd.f32 %v40, %v201
  %v203 = vpop.f32.mrb[0].mxu0
  %204 = vmatprep.mubr.f32.mxu0 0.0
  %v205 = vand.u32 %v56, 4294901760
  %v206 = vsub.f32 %v56, %v205
  %v207 = vand.u32 %v206, 4294901760
  %v208 = vsub.f32 %v206, %v207
  %v209 = vand.u32 %v208, 4294901760
  %210 = vmatmul.mubr.f32.gmra.mrb[0].mxu0 %v209
  %v211 = vpop.f32.mrb[0].mxu0
  %v212 = vadd.f32 %v40, %v211
  %v213 = vpop.f32.mrb[0].mxu0
  %214 = vmatprep.mubr.f32.mxu0 0.0
  %v215 = vand.u32 %v59, 4294901760
  %v216 = vsub.f32 %v59, %v215
  %v217 = vand.u32 %v216, 4294901760
  %v218 = vsub.f32 %v216, %v217
  %v219 = vand.u32 %v218, 4294901760
  %220 = vmatmul.mubr.f32.gmra.mrb[0].mxu0 %v219
  %v221 = vpop.f32.mrb[0].mxu0
  %v222 = vadd.f32 %v40, %v221
  %v223 = vpop.f32.mrb[0].mxu0
  %224 = vmatprep.mubr.f32.mxu0 0.0
  %v225 = vand.u32 %v62, 4294901760
  %v226 = vsub.f32 %v62, %v225
  %v227 = vand.u32 %v226, 4294901760
  %v228 = vsub.f32 %v226, %v227
  %v229 = vand.u32 %v228, 4294901760
  %230 = vmatmul.mubr.f32.gmra.mrb[0].mxu0 %v229
  %v231 = vpop.f32.mrb[0].mxu0
  %v232 = vadd.f32 %v40, %v231
  %v233 = vpop.f32.mrb[0].mxu0
  %234 = vmatprep.mubr.f32.mxu0 0.0
  %v235 = vand.u32 %v65, 4294901760
  %v236 = vsub.f32 %v65, %v235
  %v237 = vand.u32 %v236, 4294901760
  %v238 = vsub.f32 %v236, %v237
  %v239 = vand.u32 %v238, 4294901760
  %240 = vmatmul.mubr.f32.gmra.mrb[0].mxu0 %v239
  %v241 = vpop.f32.mrb[0].mxu0
  %v242 = vadd.f32 %v40, %v241
  %v243 = vpop.f32.mrb[0].mxu0
  %244 = vmatprep.mubr.f32.mxu0 0.0
  %v245 = vand.u32 %v68, 4294901760
  %v246 = vsub.f32 %v68, %v245
  %v247 = vand.u32 %v246, 4294901760
  %v248 = vsub.f32 %v246, %v247
  %v249 = vand.u32 %v248, 4294901760
  %250 = vmatmul.mubr.f32.gmra.mrb[0].mxu0 %v249
  %v251 = vpop.f32.mrb[0].mxu0
  %v252 = vadd.f32 %v40, %v251
  %v253 = vpop.f32.mrb[0].mxu0
  %254 = vmatprep.mubr.f32.mxu0 0.0
  %v255 = vand.u32 %v71, 4294901760
  %v256 = vsub.f32 %v71, %v255
  %v257 = vand.u32 %v256, 4294901760
  %v258 = vsub.f32 %v256, %v257
  %v259 = vand.u32 %v258, 4294901760
  %260 = vmatmul.mubr.f32.gmra.mrb[0].mxu0 %v259
  %v261 = vpop.f32.mrb[0].mxu0
  %v262 = vadd.f32 %v40, %v261
  %v263 = vpop.f32.mrb[0].mxu0
  %264 = vmatprep.mubr.f32.mxu0 0.0
  %v265 = vand.u32 %v74, 4294901760
  %v266 = vsub.f32 %v74, %v265
  %v267 = vand.u32 %v266, 4294901760
  %v268 = vsub.f32 %v266, %v267
  %v269 = vand.u32 %v268, 4294901760
  %270 = vmatmul.mubr.f32.gmra.mrb[0].mxu0 %v269
  %v271 = vpop.f32.mrb[0].mxu0
  %v272 = vadd.f32 %v40, %v271
  %v273 = vpop.f32.mrb[0].mxu0
  %274 = vmatprep.mubr.f32.mxu0 0.0
  %v275 = vand.u32 %v77, 4294901760
  %v276 = vsub.f32 %v77, %v275
  %v277 = vand.u32 %v276, 4294901760
  %v278 = vsub.f32 %v276, %v277
  %v279 = vand.u32 %v278, 4294901760
  %280 = vmatmul.mubr.f32.gmra.mrb[0].mxu0 %v279
  %v281 = vpop.f32.mrb[0].mxu0
  %v282 = vadd.f32 %v40, %v281
  %v283 = vpop.f32.mrb[0].mxu0
  %284 = vmatprep.mubr.f32.mxu0 0.0
  %v285 = vand.u32 %v80, 4294901760
  %v286 = vsub.f32 %v80, %v285
  %v287 = vand.u32 %v286, 4294901760
  %v288 = vsub.f32 %v286, %v287
  %v289 = vand.u32 %v288, 4294901760
  %290 = vmatmul.mubr.f32.gmra.mrb[0].mxu0 %v289
  %v291 = vpop.f32.mrb[0].mxu0
  %v292 = vadd.f32 %v40, %v291
  %v293 = vpop.f32.mrb[0].mxu0
  %294 = vmatprep.mubr.f32.mxu0 0.0
  %v295 = vand.u32 %v83, 4294901760
  %v296 = vsub.f32 %v83, %v295
  %v297 = vand.u32 %v296, 4294901760
  %v298 = vsub.f32 %v296, %v297
  %v299 = vand.u32 %v298, 4294901760
  %300 = vmatmul.mubr.f32.gmra.mrb[0].mxu0 %v299
  %v301 = vpop.f32.mrb[0].mxu0
  %v302 = vadd.f32 %v40, %v301
  %v303 = vpop.f32.mrb[0].mxu0
  %304 = vmatprep.mubr.f32.mxu0 0.0
  %v305 = vand.u32 %v86, 4294901760
  %v306 = vsub.f32 %v86, %v305
  %v307 = vand.u32 %v306, 4294901760
  %v308 = vsub.f32 %v306, %v307
  %v309 = vand.u32 %v308, 4294901760
  %310 = vmatmul.mubr.f32.gmra.mrb[0].mxu0 %v309
  %v311 = vpop.f32.mrb[0].mxu0
  %v312 = vadd.f32 %v40, %v311
  %v313 = vpop.f32.mrb[0].mxu0
  %314 = vmatprep.mubr.f32.mxu0 0.0
  %v315 = vand.u32 %v89, 4294901760
  %v316 = vsub.f32 %v89, %v315
  %v317 = vand.u32 %v316, 4294901760
  %v318 = vsub.f32 %v316, %v317
  %v319 = vand.u32 %v318, 4294901760
  %320 = vmatmul.mubr.f32.gmra.mrb[0].mxu0 %v319
  %v321 = vpop.f32.mrb[0].mxu0
  %v322 = vadd.f32 %v40, %v321
  %v323 = vpop.f32.mrb[0].mxu0
  %324 = vdwg.mxu0
  %325 = vmatprep.subr.mxu0 0.0
  %v326 = vand.u32 %v30, 4294901760
  %v327 = vsub.f32 %v30, %v326
  %v328 = vand.u32 %v327, 4294901760
  %v329 = vsub.f32 %v327, %v328
  %v330 = vand.u32 %v329, 4294901760
  %331 = vmatpush1.msra.mxu0 %v330
  %332 = vmatprep.subr.mxu0 0.0
  %v333 = vand.u32 %v31, 4294901760
  %v334 = vsub.f32 %v31, %v333
  %v335 = vand.u32 %v334, 4294901760
  %v336 = vsub.f32 %v334, %v335
  %v337 = vand.u32 %v336, 4294901760
  %338 = vmatpush1.msra.mxu0 %v337
  %339 = vmatprep.subr.mxu0 0.0
  %v340 = vand.u32 %v32, 4294901760
  %v341 = vsub.f32 %v32, %v340
  %v342 = vand.u32 %v341, 4294901760
  %v343 = vsub.f32 %v341, %v342
  %v344 = vand.u32 %v343, 4294901760
  %345 = vmatpush1.msra.mxu0 %v344
  %346 = vmatprep.subr.mxu0 0.0
  %v347 = vand.u32 %v33, 4294901760
  %v348 = vsub.f32 %v33, %v347
  %v349 = vand.u32 %v348, 4294901760
  %v350 = vsub.f32 %v348, %v349
  %v351 = vand.u32 %v350, 4294901760
  %352 = vmatpush1.msra.mxu0 %v351
  %353 = vmatprep.subr.mxu0 0.0
  %v354 = vand.u32 %v93, 4294901760
  %v355 = vsub.f32 %v93, %v354
  %v356 = vand.u32 %v355, 4294901760
  %v357 = vsub.f32 %v355, %v356
  %v358 = vand.u32 %v357, 4294901760
  %359 = vmatpush1.msra.mxu0 %v358
  %360 = vmatprep.subr.mxu0 0.0
  %361 = vmatpush1.msra.mxu0 0.0
  %362 = vmatprep.subr.mxu0 0.0
  %363 = vmatpush1.msra.mxu0 0.0
  %364 = vmatprep.subr.mxu0 0.0
  %365 = vmatpush1.msra.mxu0 0.0
  %366 = vmatprep.subr.mxu0 0.0
  %367 = vmatpush1.msra.mxu0 0.0
  %368 = vmatprep.subr.mxu0 0.0
  %369 = vmatpush1.msra.mxu0 0.0
  %370 = vmatprep.subr.mxu0 0.0
  %371 = vmatpush1.msra.mxu0 0.0
  %372 = vmatprep.subr.mxu0 0.0
  %373 = vmatpush1.msra.mxu0 0.0
  %374 = vmatprep.subr.mxu0 0.0
  %375 = vmatpush1.msra.mxu0 0.0
  %376 = vmatprep.subr.mxu0 0.0
  %377 = vmatpush1.msra.mxu0 0.0
  %378 = vmatprep.subr.mxu0 0.0
  %379 = vmatpush1.msra.mxu0 0.0
  %380 = vmatprep.subr.mxu0 0.0
  %381 = vmatpush1.msra.mxu0 0.0
  %382 = vmatprep.subr.mxu0 0.0
  %383 = vmatpush1.msra.mxu0 0.0
  %384 = vmatprep.subr.mxu0 0.0
  %385 = vmatpush1.msra.mxu0 0.0
  %386 = vmatprep.subr.mxu0 0.0
  %387 = vmatpush1.msra.mxu0 0.0
  %388 = vmatprep.subr.mxu0 0.0
  %389 = vmatpush1.msra.mxu0 0.0
  %390 = vmatprep.subr.mxu0 0.0
  %391 = vmatpush1.msra.mxu0 0.0
  %392 = vmatprep.subr.mxu0 0.0
  %393 = vmatpush1.msra.mxu0 0.0
  %394 = vmatprep.subr.mxu0 0.0
  %395 = vmatpush1.msra.mxu0 0.0
  %396 = vmatprep.subr.mxu0 0.0
  %397 = vmatpush1.msra.mxu0 0.0
  %398 = vmatprep.subr.mxu0 0.0
  %399 = vmatpush1.msra.mxu0 0.0
  %400 = vmatprep.subr.mxu0 0.0
  %401 = vmatpush1.msra.mxu0 0.0
  %402 = vmatprep.subr.mxu0 0.0
  %403 = vmatpush1.msra.mxu0 0.0
  %404 = vmatprep.subr.mxu0 0.0
  %405 = vmatpush1.msra.mxu0 0.0
  %406 = vmatprep.subr.mxu0 0.0
  %407 = vmatpush1.msra.mxu0 0.0
  %408 = vmatprep.subr.mxu0 0.0
  %409 = vmatpush1.msra.mxu0 0.0
  %410 = vmatprep.subr.mxu0 0.0
  %411 = vmatpush1.msra.mxu0 0.0
  %412 = vmatprep.subr.mxu0 0.0
  %413 = vmatpush1.msra.mxu0 0.0
  %414 = vmatprep.mubr.f32.mxu0 0.0
  %v415 = vand.u32 %v44, 4294901760
  %416 = vmatmul.mubr.f32.gmra.mrb[0].mxu0 %v415
  %v417 = vpop.f32.mrb[0].mxu0
  %v418 = vadd.f32 %v172, %v417
  %v419 = vpop.f32.mrb[0].mxu0
  %420 = vmatprep.mubr.f32.mxu0 0.0
  %v421 = vand.u32 %v47, 4294901760
  %422 = vmatmul.mubr.f32.gmra.mrb[0].mxu0 %v421
  %v423 = vpop.f32.mrb[0].mxu0
  %v424 = vadd.f32 %v182, %v423
  %v425 = vpop.f32.mrb[0].mxu0
  %426 = vmatprep.mubr.f32.mxu0 0.0
  %v427 = vand.u32 %v50, 4294901760
  %428 = vmatmul.mubr.f32.gmra.mrb[0].mxu0 %v427
  %v429 = vpop.f32.mrb[0].mxu0
  %v430 = vadd.f32 %v192, %v429
  %v431 = vpop.f32.mrb[0].mxu0
  %432 = vmatprep.mubr.f32.mxu0 0.0
  %v433 = vand.u32 %v53, 4294901760
  %434 = vmatmul.mubr.f32.gmra.mrb[0].mxu0 %v433
  %v435 = vpop.f32.mrb[0].mxu0
  %v436 = vadd.f32 %v202, %v435
  %v437 = vpop.f32.mrb[0].mxu0
  %438 = vmatprep.mubr.f32.mxu0 0.0
  %v439 = vand.u32 %v56, 4294901760
  %440 = vmatmul.mubr.f32.gmra.mrb[0].mxu0 %v439
  %v441 = vpop.f32.mrb[0].mxu0
  %v442 = vadd.f32 %v212, %v441
  %v443 = vpop.f32.mrb[0].mxu0
  %444 = vmatprep.mubr.f32.mxu0 0.0
  %v445 = vand.u32 %v59, 4294901760
  %446 = vmatmul.mubr.f32.gmra.mrb[0].mxu0 %v445
  %v447 = vpop.f32.mrb[0].mxu0
  %v448 = vadd.f32 %v222, %v447
  %v449 = vpop.f32.mrb[0].mxu0
  %450 = vmatprep.mubr.f32.mxu0 0.0
  %v451 = vand.u32 %v62, 4294901760
  %452 = vmatmul.mubr.f32.gmra.mrb[0].mxu0 %v451
  %v453 = vpop.f32.mrb[0].mxu0
  %v454 = vadd.f32 %v232, %v453
  %v455 = vpop.f32.mrb[0].mxu0
  %456 = vmatprep.mubr.f32.mxu0 0.0
  %v457 = vand.u32 %v65, 4294901760
  %458 = vmatmul.mubr.f32.gmra.mrb[0].mxu0 %v457
  %v459 = vpop.f32.mrb[0].mxu0
  %v460 = vadd.f32 %v242, %v459
  %v461 = vpop.f32.mrb[0].mxu0
  %462 = vmatprep.mubr.f32.mxu0 0.0
  %v463 = vand.u32 %v68, 4294901760
  %464 = vmatmul.mubr.f32.gmra.mrb[0].mxu0 %v463
  %v465 = vpop.f32.mrb[0].mxu0
  %v466 = vadd.f32 %v252, %v465
  %v467 = vpop.f32.mrb[0].mxu0
  %468 = vmatprep.mubr.f32.mxu0 0.0
  %v469 = vand.u32 %v71, 4294901760
  %470 = vmatmul.mubr.f32.gmra.mrb[0].mxu0 %v469
  %v471 = vpop.f32.mrb[0].mxu0
  %v472 = vadd.f32 %v262, %v471
  %v473 = vpop.f32.mrb[0].mxu0
  %474 = vmatprep.mubr.f32.mxu0 0.0
  %v475 = vand.u32 %v74, 4294901760
  %476 = vmatmul.mubr.f32.gmra.mrb[0].mxu0 %v475
  %v477 = vpop.f32.mrb[0].mxu0
  %v478 = vadd.f32 %v272, %v477
  %v479 = vpop.f32.mrb[0].mxu0
  %480 = vmatprep.mubr.f32.mxu0 0.0
  %v481 = vand.u32 %v77, 4294901760
  %482 = vmatmul.mubr.f32.gmra.mrb[0].mxu0 %v481
  %v483 = vpop.f32.mrb[0].mxu0
  %v484 = vadd.f32 %v282, %v483
  %v485 = vpop.f32.mrb[0].mxu0
  %486 = vmatprep.mubr.f32.mxu0 0.0
  %v487 = vand.u32 %v80, 4294901760
  %488 = vmatmul.mubr.f32.gmra.mrb[0].mxu0 %v487
  %v489 = vpop.f32.mrb[0].mxu0
  %v490 = vadd.f32 %v292, %v489
  %v491 = vpop.f32.mrb[0].mxu0
  %492 = vmatprep.mubr.f32.mxu0 0.0
  %v493 = vand.u32 %v83, 4294901760
  %494 = vmatmul.mubr.f32.gmra.mrb[0].mxu0 %v493
  %v495 = vpop.f32.mrb[0].mxu0
  %v496 = vadd.f32 %v302, %v495
  %v497 = vpop.f32.mrb[0].mxu0
  %498 = vmatprep.mubr.f32.mxu0 0.0
  %v499 = vand.u32 %v86, 4294901760
  %500 = vmatmul.mubr.f32.gmra.mrb[0].mxu0 %v499
  %v501 = vpop.f32.mrb[0].mxu0
  %v502 = vadd.f32 %v312, %v501
  %v503 = vpop.f32.mrb[0].mxu0
  %504 = vmatprep.mubr.f32.mxu0 0.0
  %v505 = vand.u32 %v89, 4294901760
  %506 = vmatmul.mubr.f32.gmra.mrb[0].mxu0 %v505
  %v507 = vpop.f32.mrb[0].mxu0
  %v508 = vadd.f32 %v322, %v507
  %v509 = vpop.f32.mrb[0].mxu0
  %510 = vdwg.mxu0
  %511 = vmatprep.subr.mxu0 0.0
  %v512 = vand.u32 %v30, 4294901760
  %v513 = vsub.f32 %v30, %v512
  %514 = vmatpush1.msra.mxu0 %v513
  %515 = vmatprep.subr.mxu0 0.0
  %v516 = vand.u32 %v31, 4294901760
  %v517 = vsub.f32 %v31, %v516
  %518 = vmatpush1.msra.mxu0 %v517
  %519 = vmatprep.subr.mxu0 0.0
  %v520 = vand.u32 %v32, 4294901760
  %v521 = vsub.f32 %v32, %v520
  %522 = vmatpush1.msra.mxu0 %v521
  %523 = vmatprep.subr.mxu0 0.0
  %v524 = vand.u32 %v33, 4294901760
  %v525 = vsub.f32 %v33, %v524
  %526 = vmatpush1.msra.mxu0 %v525
  %527 = vmatprep.subr.mxu0 0.0
  %v528 = vand.u32 %v93, 4294901760
  %v529 = vsub.f32 %v93, %v528
  %530 = vmatpush1.msra.mxu0 %v529
  %531 = vmatprep.subr.mxu0 0.0
  %532 = vmatpush1.msra.mxu0 0.0
  %533 = vmatprep.subr.mxu0 0.0
  %534 = vmatpush1.msra.mxu0 0.0
  %535 = vmatprep.subr.mxu0 0.0
  %536 = vmatpush1.msra.mxu0 0.0
  %537 = vmatprep.subr.mxu0 0.0
  %538 = vmatpush1.msra.mxu0 0.0
  %539 = vmatprep.subr.mxu0 0.0
  %540 = vmatpush1.msra.mxu0 0.0
  %541 = vmatprep.subr.mxu0 0.0
  %542 = vmatpush1.msra.mxu0 0.0
  %543 = vmatprep.subr.mxu0 0.0
  %544 = vmatpush1.msra.mxu0 0.0
  %545 = vmatprep.subr.mxu0 0.0
  %546 = vmatpush1.msra.mxu0 0.0
  %547 = vmatprep.subr.mxu0 0.0
  %548 = vmatpush1.msra.mxu0 0.0
  %549 = vmatprep.subr.mxu0 0.0
  %550 = vmatpush1.msra.mxu0 0.0
  %551 = vmatprep.subr.mxu0 0.0
  %552 = vmatpush1.msra.mxu0 0.0
  %553 = vmatprep.subr.mxu0 0.0
  %554 = vmatpush1.msra.mxu0 0.0
  %555 = vmatprep.subr.mxu0 0.0
  %556 = vmatpush1.msra.mxu0 0.0
  %557 = vmatprep.subr.mxu0 0.0
  %558 = vmatpush1.msra.mxu0 0.0
  %559 = vmatprep.subr.mxu0 0.0
  %560 = vmatpush1.msra.mxu0 0.0
  %561 = vmatprep.subr.mxu0 0.0
  %562 = vmatpush1.msra.mxu0 0.0
  %563 = vmatprep.subr.mxu0 0.0
  %564 = vmatpush1.msra.mxu0 0.0
  %565 = vmatprep.subr.mxu0 0.0
  %566 = vmatpush1.msra.mxu0 0.0
  %567 = vmatprep.subr.mxu0 0.0
  %568 = vmatpush1.msra.mxu0 0.0
  %569 = vmatprep.subr.mxu0 0.0
  %570 = vmatpush1.msra.mxu0 0.0
  %571 = vmatprep.subr.mxu0 0.0
  %572 = vmatpush1.msra.mxu0 0.0
  %573 = vmatprep.subr.mxu0 0.0
  %574 = vmatpush1.msra.mxu0 0.0
  %575 = vmatprep.subr.mxu0 0.0
  %576 = vmatpush1.msra.mxu0 0.0
  %577 = vmatprep.subr.mxu0 0.0
  %578 = vmatpush1.msra.mxu0 0.0
  %579 = vmatprep.subr.mxu0 0.0
  %580 = vmatpush1.msra.mxu0 0.0
  %581 = vmatprep.subr.mxu0 0.0
  %582 = vmatpush1.msra.mxu0 0.0
  %583 = vmatprep.subr.mxu0 0.0
  %584 = vmatpush1.msra.mxu0 0.0
  %585 = vmatprep.mubr.f32.mxu0 0.0
  %v586 = vand.u32 %v44, 4294901760
  %v587 = vsub.f32 %v44, %v586
  %588 = vmatmul.mubr.f32.gmra.mrb[0].mxu0 %v587
  %v589 = vpop.f32.mrb[0].mxu0
  %v590 = vadd.f32 %v418, %v589
  %v591 = vpop.f32.mrb[0].mxu0
  %592 = vmatprep.mubr.f32.mxu0 0.0
  %v593 = vand.u32 %v47, 4294901760
  %v594 = vsub.f32 %v47, %v593
  %595 = vmatmul.mubr.f32.gmra.mrb[0].mxu0 %v594
  %v596 = vpop.f32.mrb[0].mxu0
  %v597 = vadd.f32 %v424, %v596
  %v598 = vpop.f32.mrb[0].mxu0
  %599 = vmatprep.mubr.f32.mxu0 0.0
  %v600 = vand.u32 %v50, 4294901760
  %v601 = vsub.f32 %v50, %v600
  %602 = vmatmul.mubr.f32.gmra.mrb[0].mxu0 %v601
  %v603 = vpop.f32.mrb[0].mxu0
  %v604 = vadd.f32 %v430, %v603
  %v605 = vpop.f32.mrb[0].mxu0
  %606 = vmatprep.mubr.f32.mxu0 0.0
  %v607 = vand.u32 %v53, 4294901760
  %v608 = vsub.f32 %v53, %v607
  %609 = vmatmul.mubr.f32.gmra.mrb[0].mxu0 %v608
  %v610 = vpop.f32.mrb[0].mxu0
  %v611 = vadd.f32 %v436, %v610
  %v612 = vpop.f32.mrb[0].mxu0
  %613 = vmatprep.mubr.f32.mxu0 0.0
  %v614 = vand.u32 %v56, 4294901760
  %v615 = vsub.f32 %v56, %v614
  %616 = vmatmul.mubr.f32.gmra.mrb[0].mxu0 %v615
  %v617 = vpop.f32.mrb[0].mxu0
  %v618 = vadd.f32 %v442, %v617
  %v619 = vpop.f32.mrb[0].mxu0
  %620 = vmatprep.mubr.f32.mxu0 0.0
  %v621 = vand.u32 %v59, 4294901760
  %v622 = vsub.f32 %v59, %v621
  %623 = vmatmul.mubr.f32.gmra.mrb[0].mxu0 %v622
  %v624 = vpop.f32.mrb[0].mxu0
  %v625 = vadd.f32 %v448, %v624
  %v626 = vpop.f32.mrb[0].mxu0
  %627 = vmatprep.mubr.f32.mxu0 0.0
  %v628 = vand.u32 %v62, 4294901760
  %v629 = vsub.f32 %v62, %v628
  %630 = vmatmul.mubr.f32.gmra.mrb[0].mxu0 %v629
  %v631 = vpop.f32.mrb[0].mxu0
  %v632 = vadd.f32 %v454, %v631
  %v633 = vpop.f32.mrb[0].mxu0
  %634 = vmatprep.mubr.f32.mxu0 0.0
  %v635 = vand.u32 %v65, 4294901760
  %v636 = vsub.f32 %v65, %v635
  %637 = vmatmul.mubr.f32.gmra.mrb[0].mxu0 %v636
  %v638 = vpop.f32.mrb[0].mxu0
  %v639 = vadd.f32 %v460, %v638
  %v640 = vpop.f32.mrb[0].mxu0
  %641 = vmatprep.mubr.f32.mxu0 0.0
  %v642 = vand.u32 %v68, 4294901760
  %v643 = vsub.f32 %v68, %v642
  %644 = vmatmul.mubr.f32.gmra.mrb[0].mxu0 %v643
  %v645 = vpop.f32.mrb[0].mxu0
  %v646 = vadd.f32 %v466, %v645
  %v647 = vpop.f32.mrb[0].mxu0
  %648 = vmatprep.mubr.f32.mxu0 0.0
  %v649 = vand.u32 %v71, 4294901760
  %v650 = vsub.f32 %v71, %v649
  %651 = vmatmul.mubr.f32.gmra.mrb[0].mxu0 %v650
  %v652 = vpop.f32.mrb[0].mxu0
  %v653 = vadd.f32 %v472, %v652
  %v654 = vpop.f32.mrb[0].mxu0
  %655 = vmatprep.mubr.f32.mxu0 0.0
  %v656 = vand.u32 %v74, 4294901760
  %v657 = vsub.f32 %v74, %v656
  %658 = vmatmul.mubr.f32.gmra.mrb[0].mxu0 %v657
  %v659 = vpop.f32.mrb[0].mxu0
  %v660 = vadd.f32 %v478, %v659
  %v661 = vpop.f32.mrb[0].mxu0
  %662 = vmatprep.mubr.f32.mxu0 0.0
  %v663 = vand.u32 %v77, 4294901760
  %v664 = vsub.f32 %v77, %v663
  %665 = vmatmul.mubr.f32.gmra.mrb[0].mxu0 %v664
  %v666 = vpop.f32.mrb[0].mxu0
  %v667 = vadd.f32 %v484, %v666
  %v668 = vpop.f32.mrb[0].mxu0
  %669 = vmatprep.mubr.f32.mxu0 0.0
  %v670 = vand.u32 %v80, 4294901760
  %v671 = vsub.f32 %v80, %v670
  %672 = vmatmul.mubr.f32.gmra.mrb[0].mxu0 %v671
  %v673 = vpop.f32.mrb[0].mxu0
  %v674 = vadd.f32 %v490, %v673
  %v675 = vpop.f32.mrb[0].mxu0
  %676 = vmatprep.mubr.f32.mxu0 0.0
  %v677 = vand.u32 %v83, 4294901760
  %v678 = vsub.f32 %v83, %v677
  %679 = vmatmul.mubr.f32.gmra.mrb[0].mxu0 %v678
  %v680 = vpop.f32.mrb[0].mxu0
  %v681 = vadd.f32 %v496, %v680
  %v682 = vpop.f32.mrb[0].mxu0
  %683 = vmatprep.mubr.f32.mxu0 0.0
  %v684 = vand.u32 %v86, 4294901760
  %v685 = vsub.f32 %v86, %v684
  %686 = vmatmul.mubr.f32.gmra.mrb[0].mxu0 %v685
  %v687 = vpop.f32.mrb[0].mxu0
  %v688 = vadd.f32 %v502, %v687
  %v689 = vpop.f32.mrb[0].mxu0
  %690 = vmatprep.mubr.f32.mxu0 0.0
  %v691 = vand.u32 %v89, 4294901760
  %v692 = vsub.f32 %v89, %v691
  %693 = vmatmul.mubr.f32.gmra.mrb[0].mxu0 %v692
  %v694 = vpop.f32.mrb[0].mxu0
  %v695 = vadd.f32 %v508, %v694
  %v696 = vpop.f32.mrb[0].mxu0
  %697 = vdwg.mxu0
  %698 = vmatprep.subr.mxu0 0.0
  %v699 = vand.u32 %v30, 4294901760
  %700 = vmatpush1.msra.mxu0 %v699
  %701 = vmatprep.subr.mxu0 0.0
  %v702 = vand.u32 %v31, 4294901760
  %703 = vmatpush1.msra.mxu0 %v702
  %704 = vmatprep.subr.mxu0 0.0
  %v705 = vand.u32 %v32, 4294901760
  %706 = vmatpush1.msra.mxu0 %v705
  %707 = vmatprep.subr.mxu0 0.0
  %v708 = vand.u32 %v33, 4294901760
  %709 = vmatpush1.msra.mxu0 %v708
  %710 = vmatprep.subr.mxu0 0.0
  %v711 = vand.u32 %v93, 4294901760
  %712 = vmatpush1.msra.mxu0 %v711
  %713 = vmatprep.subr.mxu0 0.0
  %714 = vmatpush1.msra.mxu0 0.0
  %715 = vmatprep.subr.mxu0 0.0
  %716 = vmatpush1.msra.mxu0 0.0
  %717 = vmatprep.subr.mxu0 0.0
  %718 = vmatpush1.msra.mxu0 0.0
  %719 = vmatprep.subr.mxu0 0.0
  %720 = vmatpush1.msra.mxu0 0.0
  %721 = vmatprep.subr.mxu0 0.0
  %722 = vmatpush1.msra.mxu0 0.0
  %723 = vmatprep.subr.mxu0 0.0
  %724 = vmatpush1.msra.mxu0 0.0
  %725 = vmatprep.subr.mxu0 0.0
  %726 = vmatpush1.msra.mxu0 0.0
  %727 = vmatprep.subr.mxu0 0.0
  %728 = vmatpush1.msra.mxu0 0.0
  %729 = vmatprep.subr.mxu0 0.0
  %730 = vmatpush1.msra.mxu0 0.0
  %731 = vmatprep.subr.mxu0 0.0
  %732 = vmatpush1.msra.mxu0 0.0
  %733 = vmatprep.subr.mxu0 0.0
  %734 = vmatpush1.msra.mxu0 0.0
  %735 = vmatprep.subr.mxu0 0.0
  %736 = vmatpush1.msra.mxu0 0.0
  %737 = vmatprep.subr.mxu0 0.0
  %738 = vmatpush1.msra.mxu0 0.0
  %739 = vmatprep.subr.mxu0 0.0
  %740 = vmatpush1.msra.mxu0 0.0
  %741 = vmatprep.subr.mxu0 0.0
  %742 = vmatpush1.msra.mxu0 0.0
  %743 = vmatprep.subr.mxu0 0.0
  %744 = vmatpush1.msra.mxu0 0.0
  %745 = vmatprep.subr.mxu0 0.0
  %746 = vmatpush1.msra.mxu0 0.0
  %747 = vmatprep.subr.mxu0 0.0
  %748 = vmatpush1.msra.mxu0 0.0
  %749 = vmatprep.subr.mxu0 0.0
  %750 = vmatpush1.msra.mxu0 0.0
  %751 = vmatprep.subr.mxu0 0.0
  %752 = vmatpush1.msra.mxu0 0.0
  %753 = vmatprep.subr.mxu0 0.0
  %754 = vmatpush1.msra.mxu0 0.0
  %755 = vmatprep.subr.mxu0 0.0
  %756 = vmatpush1.msra.mxu0 0.0
  %757 = vmatprep.subr.mxu0 0.0
  %758 = vmatpush1.msra.mxu0 0.0
  %759 = vmatprep.subr.mxu0 0.0
  %760 = vmatpush1.msra.mxu0 0.0
  %761 = vmatprep.subr.mxu0 0.0
  %762 = vmatpush1.msra.mxu0 0.0
  %763 = vmatprep.subr.mxu0 0.0
  %764 = vmatpush1.msra.mxu0 0.0
  %765 = vmatprep.subr.mxu0 0.0
  %766 = vmatpush1.msra.mxu0 0.0
  %767 = vmatprep.mubr.f32.mxu0 0.0
  %v768 = vand.u32 %v44, 4294901760
  %v769 = vsub.f32 %v44, %v768
  %v770 = vand.u32 %v769, 4294901760
  %771 = vmatmul.mubr.f32.gmra.mrb[0].mxu0 %v770
  %v772 = vpop.f32.mrb[0].mxu0
  %v773 = vadd.f32 %v590, %v772
  %v774 = vpop.f32.mrb[0].mxu0
  %775 = vmatprep.mubr.f32.mxu0 0.0
  %v776 = vand.u32 %v47, 4294901760
  %v777 = vsub.f32 %v47, %v776
  %v778 = vand.u32 %v777, 4294901760
  %779 = vmatmul.mubr.f32.gmra.mrb[0].mxu0 %v778
  %v780 = vpop.f32.mrb[0].mxu0
  %v781 = vadd.f32 %v597, %v780
  %v782 = vpop.f32.mrb[0].mxu0
  %783 = vmatprep.mubr.f32.mxu0 0.0
  %v784 = vand.u32 %v50, 4294901760
  %v785 = vsub.f32 %v50, %v784
  %v786 = vand.u32 %v785, 4294901760
  %787 = vmatmul.mubr.f32.gmra.mrb[0].mxu0 %v786
  %v788 = vpop.f32.mrb[0].mxu0
  %v789 = vadd.f32 %v604, %v788
  %v790 = vpop.f32.mrb[0].mxu0
  %791 = vmatprep.mubr.f32.mxu0 0.0
  %v792 = vand.u32 %v53, 4294901760
  %v793 = vsub.f32 %v53, %v792
  %v794 = vand.u32 %v793, 4294901760
  %795 = vmatmul.mubr.f32.gmra.mrb[0].mxu0 %v794
  %v796 = vpop.f32.mrb[0].mxu0
  %v797 = vadd.f32 %v611, %v796
  %v798 = vpop.f32.mrb[0].mxu0
  %799 = vmatprep.mubr.f32.mxu0 0.0
  %v800 = vand.u32 %v56, 4294901760
  %v801 = vsub.f32 %v56, %v800
  %v802 = vand.u32 %v801, 4294901760
  %803 = vmatmul.mubr.f32.gmra.mrb[0].mxu0 %v802
  %v804 = vpop.f32.mrb[0].mxu0
  %v805 = vadd.f32 %v618, %v804
  %v806 = vpop.f32.mrb[0].mxu0
  %807 = vmatprep.mubr.f32.mxu0 0.0
  %v808 = vand.u32 %v59, 4294901760
  %v809 = vsub.f32 %v59, %v808
  %v810 = vand.u32 %v809, 4294901760
  %811 = vmatmul.mubr.f32.gmra.mrb[0].mxu0 %v810
  %v812 = vpop.f32.mrb[0].mxu0
  %v813 = vadd.f32 %v625, %v812
  %v814 = vpop.f32.mrb[0].mxu0
  %815 = vmatprep.mubr.f32.mxu0 0.0
  %v816 = vand.u32 %v62, 4294901760
  %v817 = vsub.f32 %v62, %v816
  %v818 = vand.u32 %v817, 4294901760
  %819 = vmatmul.mubr.f32.gmra.mrb[0].mxu0 %v818
  %v820 = vpop.f32.mrb[0].mxu0
  %v821 = vadd.f32 %v632, %v820
  %v822 = vpop.f32.mrb[0].mxu0
  %823 = vmatprep.mubr.f32.mxu0 0.0
  %v824 = vand.u32 %v65, 4294901760
  %v825 = vsub.f32 %v65, %v824
  %v826 = vand.u32 %v825, 4294901760
  %827 = vmatmul.mubr.f32.gmra.mrb[0].mxu0 %v826
  %v828 = vpop.f32.mrb[0].mxu0
  %v829 = vadd.f32 %v639, %v828
  %v830 = vpop.f32.mrb[0].mxu0
  %831 = vmatprep.mubr.f32.mxu0 0.0
  %v832 = vand.u32 %v68, 4294901760
  %v833 = vsub.f32 %v68, %v832
  %v834 = vand.u32 %v833, 4294901760
  %835 = vmatmul.mubr.f32.gmra.mrb[0].mxu0 %v834
  %v836 = vpop.f32.mrb[0].mxu0
  %v837 = vadd.f32 %v646, %v836
  %v838 = vpop.f32.mrb[0].mxu0
  %839 = vmatprep.mubr.f32.mxu0 0.0
  %v840 = vand.u32 %v71, 4294901760
  %v841 = vsub.f32 %v71, %v840
  %v842 = vand.u32 %v841, 4294901760
  %843 = vmatmul.mubr.f32.gmra.mrb[0].mxu0 %v842
  %v844 = vpop.f32.mrb[0].mxu0
  %v845 = vadd.f32 %v653, %v844
  %v846 = vpop.f32.mrb[0].mxu0
  %847 = vmatprep.mubr.f32.mxu0 0.0
  %v848 = vand.u32 %v74, 4294901760
  %v849 = vsub.f32 %v74, %v848
  %v850 = vand.u32 %v849, 4294901760
  %851 = vmatmul.mubr.f32.gmra.mrb[0].mxu0 %v850
  %v852 = vpop.f32.mrb[0].mxu0
  %v853 = vadd.f32 %v660, %v852
  %v854 = vpop.f32.mrb[0].mxu0
  %855 = vmatprep.mubr.f32.mxu0 0.0
  %v856 = vand.u32 %v77, 4294901760
  %v857 = vsub.f32 %v77, %v856
  %v858 = vand.u32 %v857, 4294901760
  %859 = vmatmul.mubr.f32.gmra.mrb[0].mxu0 %v858
  %v860 = vpop.f32.mrb[0].mxu0
  %v861 = vadd.f32 %v667, %v860
  %v862 = vpop.f32.mrb[0].mxu0
  %863 = vmatprep.mubr.f32.mxu0 0.0
  %v864 = vand.u32 %v80, 4294901760
  %v865 = vsub.f32 %v80, %v864
  %v866 = vand.u32 %v865, 4294901760
  %867 = vmatmul.mubr.f32.gmra.mrb[0].mxu0 %v866
  %v868 = vpop.f32.mrb[0].mxu0
  %v869 = vadd.f32 %v674, %v868
  %v870 = vpop.f32.mrb[0].mxu0
  %871 = vmatprep.mubr.f32.mxu0 0.0
  %v872 = vand.u32 %v83, 4294901760
  %v873 = vsub.f32 %v83, %v872
  %v874 = vand.u32 %v873, 4294901760
  %875 = vmatmul.mubr.f32.gmra.mrb[0].mxu0 %v874
  %v876 = vpop.f32.mrb[0].mxu0
  %v877 = vadd.f32 %v681, %v876
  %v878 = vpop.f32.mrb[0].mxu0
  %879 = vmatprep.mubr.f32.mxu0 0.0
  %v880 = vand.u32 %v86, 4294901760
  %v881 = vsub.f32 %v86, %v880
  %v882 = vand.u32 %v881, 4294901760
  %883 = vmatmul.mubr.f32.gmra.mrb[0].mxu0 %v882
  %v884 = vpop.f32.mrb[0].mxu0
  %v885 = vadd.f32 %v688, %v884
  %v886 = vpop.f32.mrb[0].mxu0
  %887 = vmatprep.mubr.f32.mxu0 0.0
  %v888 = vand.u32 %v89, 4294901760
  %v889 = vsub.f32 %v89, %v888
  %v890 = vand.u32 %v889, 4294901760
  %891 = vmatmul.mubr.f32.gmra.mrb[0].mxu0 %v890
  %v892 = vpop.f32.mrb[0].mxu0
  %v893 = vadd.f32 %v695, %v892
  %v894 = vpop.f32.mrb[0].mxu0
  %895 = vdwg.mxu0
  %896 = vmatprep.subr.mxu0 0.0
  %v897 = vand.u32 %v30, 4294901760
  %v898 = vsub.f32 %v30, %v897
  %v899 = vand.u32 %v898, 4294901760
  %900 = vmatpush1.msra.mxu0 %v899
  %901 = vmatprep.subr.mxu0 0.0
  %v902 = vand.u32 %v31, 4294901760
  %v903 = vsub.f32 %v31, %v902
  %v904 = vand.u32 %v903, 4294901760
  %905 = vmatpush1.msra.mxu0 %v904
  %906 = vmatprep.subr.mxu0 0.0
  %v907 = vand.u32 %v32, 4294901760
  %v908 = vsub.f32 %v32, %v907
  %v909 = vand.u32 %v908, 4294901760
  %910 = vmatpush1.msra.mxu0 %v909
  %911 = vmatprep.subr.mxu0 0.0
  %v912 = vand.u32 %v33, 4294901760
  %v913 = vsub.f32 %v33, %v912
  %v914 = vand.u32 %v913, 4294901760
  %915 = vmatpush1.msra.mxu0 %v914
  %916 = vmatprep.subr.mxu0 0.0
  %v917 = vand.u32 %v93, 4294901760
  %v918 = vsub.f32 %v93, %v917
  %v919 = vand.u32 %v918, 4294901760
  %920 = vmatpush1.msra.mxu0 %v919
  %921 = vmatprep.subr.mxu0 0.0
  %922 = vmatpush1.msra.mxu0 0.0
  %923 = vmatprep.subr.mxu0 0.0
  %924 = vmatpush1.msra.mxu0 0.0
  %925 = vmatprep.subr.mxu0 0.0
  %926 = vmatpush1.msra.mxu0 0.0
  %927 = vmatprep.subr.mxu0 0.0
  %928 = vmatpush1.msra.mxu0 0.0
  %929 = vmatprep.subr.mxu0 0.0
  %930 = vmatpush1.msra.mxu0 0.0
  %931 = vmatprep.subr.mxu0 0.0
  %932 = vmatpush1.msra.mxu0 0.0
  %933 = vmatprep.subr.mxu0 0.0
  %934 = vmatpush1.msra.mxu0 0.0
  %935 = vmatprep.subr.mxu0 0.0
  %936 = vmatpush1.msra.mxu0 0.0
  %937 = vmatprep.subr.mxu0 0.0
  %938 = vmatpush1.msra.mxu0 0.0
  %939 = vmatprep.subr.mxu0 0.0
  %940 = vmatpush1.msra.mxu0 0.0
  %941 = vmatprep.subr.mxu0 0.0
  %942 = vmatpush1.msra.mxu0 0.0
  %943 = vmatprep.subr.mxu0 0.0
  %944 = vmatpush1.msra.mxu0 0.0
  %945 = vmatprep.subr.mxu0 0.0
  %946 = vmatpush1.msra.mxu0 0.0
  %947 = vmatprep.subr.mxu0 0.0
  %948 = vmatpush1.msra.mxu0 0.0
  %949 = vmatprep.subr.mxu0 0.0
  %950 = vmatpush1.msra.mxu0 0.0
  %951 = vmatprep.subr.mxu0 0.0
  %952 = vmatpush1.msra.mxu0 0.0
  %953 = vmatprep.subr.mxu0 0.0
  %954 = vmatpush1.msra.mxu0 0.0
  %955 = vmatprep.subr.mxu0 0.0
  %956 = vmatpush1.msra.mxu0 0.0
  %957 = vmatprep.subr.mxu0 0.0
  %958 = vmatpush1.msra.mxu0 0.0
  %959 = vmatprep.subr.mxu0 0.0
  %960 = vmatpush1.msra.mxu0 0.0
  %961 = vmatprep.subr.mxu0 0.0
  %962 = vmatpush1.msra.mxu0 0.0
  %963 = vmatprep.subr.mxu0 0.0
  %964 = vmatpush1.msra.mxu0 0.0
  %965 = vmatprep.subr.mxu0 0.0
  %966 = vmatpush1.msra.mxu0 0.0
  %967 = vmatprep.subr.mxu0 0.0
  %968 = vmatpush1.msra.mxu0 0.0
  %969 = vmatprep.subr.mxu0 0.0
  %970 = vmatpush1.msra.mxu0 0.0
  %971 = vmatprep.subr.mxu0 0.0
  %972 = vmatpush1.msra.mxu0 0.0
  %973 = vmatprep.subr.mxu0 0.0
  %974 = vmatpush1.msra.mxu0 0.0
  %975 = vmatprep.mubr.f32.mxu0 0.0
  %v976 = vand.u32 %v44, 4294901760
  %977 = vmatmul.mubr.f32.gmra.mrb[0].mxu0 %v976
  %v978 = vpop.f32.mrb[0].mxu0
  %v979 = vadd.f32 %v773, %v978
  %v980 = vpop.f32.mrb[0].mxu0
  %981 = vmatprep.mubr.f32.mxu0 0.0
  %v982 = vand.u32 %v47, 4294901760
  %983 = vmatmul.mubr.f32.gmra.mrb[0].mxu0 %v982
  %v984 = vpop.f32.mrb[0].mxu0
  %v985 = vadd.f32 %v781, %v984
  %v986 = vpop.f32.mrb[0].mxu0
  %987 = vmatprep.mubr.f32.mxu0 0.0
  %v988 = vand.u32 %v50, 4294901760
  %989 = vmatmul.mubr.f32.gmra.mrb[0].mxu0 %v988
  %v990 = vpop.f32.mrb[0].mxu0
  %v991 = vadd.f32 %v789, %v990
  %v992 = vpop.f32.mrb[0].mxu0
  %993 = vmatprep.mubr.f32.mxu0 0.0
  %v994 = vand.u32 %v53, 4294901760
  %995 = vmatmul.mubr.f32.gmra.mrb[0].mxu0 %v994
  %v996 = vpop.f32.mrb[0].mxu0
  %v997 = vadd.f32 %v797, %v996
  %v998 = vpop.f32.mrb[0].mxu0
  %999 = vmatprep.mubr.f32.mxu0 0.0
  %v1000 = vand.u32 %v56, 4294901760
  %1001 = vmatmul.mubr.f32.gmra.mrb[0].mxu0 %v1000
  %v1002 = vpop.f32.mrb[0].mxu0
  %v1003 = vadd.f32 %v805, %v1002
  %v1004 = vpop.f32.mrb[0].mxu0
  %1005 = vmatprep.mubr.f32.mxu0 0.0
  %v1006 = vand.u32 %v59, 4294901760
  %1007 = vmatmul.mubr.f32.gmra.mrb[0].mxu0 %v1006
  %v1008 = vpop.f32.mrb[0].mxu0
  %v1009 = vadd.f32 %v813, %v1008
  %v1010 = vpop.f32.mrb[0].mxu0
  %1011 = vmatprep.mubr.f32.mxu0 0.0
  %v1012 = vand.u32 %v62, 4294901760
  %1013 = vmatmul.mubr.f32.gmra.mrb[0].mxu0 %v1012
  %v1014 = vpop.f32.mrb[0].mxu0
  %v1015 = vadd.f32 %v821, %v1014
  %v1016 = vpop.f32.mrb[0].mxu0
  %1017 = vmatprep.mubr.f32.mxu0 0.0
  %v1018 = vand.u32 %v65, 4294901760
  %1019 = vmatmul.mubr.f32.gmra.mrb[0].mxu0 %v1018
  %v1020 = vpop.f32.mrb[0].mxu0
  %v1021 = vadd.f32 %v829, %v1020
  %v1022 = vpop.f32.mrb[0].mxu0
  %1023 = vmatprep.mubr.f32.mxu0 0.0
  %v1024 = vand.u32 %v68, 4294901760
  %1025 = vmatmul.mubr.f32.gmra.mrb[0].mxu0 %v1024
  %v1026 = vpop.f32.mrb[0].mxu0
  %v1027 = vadd.f32 %v837, %v1026
  %v1028 = vpop.f32.mrb[0].mxu0
  %1029 = vmatprep.mubr.f32.mxu0 0.0
  %v1030 = vand.u32 %v71, 4294901760
  %1031 = vmatmul.mubr.f32.gmra.mrb[0].mxu0 %v1030
  %v1032 = vpop.f32.mrb[0].mxu0
  %v1033 = vadd.f32 %v845, %v1032
  %v1034 = vpop.f32.mrb[0].mxu0
  %1035 = vmatprep.mubr.f32.mxu0 0.0
  %v1036 = vand.u32 %v74, 4294901760
  %1037 = vmatmul.mubr.f32.gmra.mrb[0].mxu0 %v1036
  %v1038 = vpop.f32.mrb[0].mxu0
  %v1039 = vadd.f32 %v853, %v1038
  %v1040 = vpop.f32.mrb[0].mxu0
  %1041 = vmatprep.mubr.f32.mxu0 0.0
  %v1042 = vand.u32 %v77, 4294901760
  %1043 = vmatmul.mubr.f32.gmra.mrb[0].mxu0 %v1042
  %v1044 = vpop.f32.mrb[0].mxu0
  %v1045 = vadd.f32 %v861, %v1044
  %v1046 = vpop.f32.mrb[0].mxu0
  %1047 = vmatprep.mubr.f32.mxu0 0.0
  %v1048 = vand.u32 %v80, 4294901760
  %1049 = vmatmul.mubr.f32.gmra.mrb[0].mxu0 %v1048
  %v1050 = vpop.f32.mrb[0].mxu0
  %v1051 = vadd.f32 %v869, %v1050
  %v1052 = vpop.f32.mrb[0].mxu0
  %1053 = vmatprep.mubr.f32.mxu0 0.0
  %v1054 = vand.u32 %v83, 4294901760
  %1055 = vmatmul.mubr.f32.gmra.mrb[0].mxu0 %v1054
  %v1056 = vpop.f32.mrb[0].mxu0
  %v1057 = vadd.f32 %v877, %v1056
  %v1058 = vpop.f32.mrb[0].mxu0
  %1059 = vmatprep.mubr.f32.mxu0 0.0
  %v1060 = vand.u32 %v86, 4294901760
  %1061 = vmatmul.mubr.f32.gmra.mrb[0].mxu0 %v1060
  %v1062 = vpop.f32.mrb[0].mxu0
  %v1063 = vadd.f32 %v885, %v1062
  %v1064 = vpop.f32.mrb[0].mxu0
  %1065 = vmatprep.mubr.f32.mxu0 0.0
  %v1066 = vand.u32 %v89, 4294901760
  %1067 = vmatmul.mubr.f32.gmra.mrb[0].mxu0 %v1066
  %v1068 = vpop.f32.mrb[0].mxu0
  %v1069 = vadd.f32 %v893, %v1068
  %v1070 = vpop.f32.mrb[0].mxu0
  %1071 = vdwg.mxu0
  %1072 = vmatprep.subr.mxu0 0.0
  %v1073 = vand.u32 %v30, 4294901760
  %1074 = vmatpush1.msra.mxu0 %v1073
  %1075 = vmatprep.subr.mxu0 0.0
  %v1076 = vand.u32 %v31, 4294901760
  %1077 = vmatpush1.msra.mxu0 %v1076
  %1078 = vmatprep.subr.mxu0 0.0
  %v1079 = vand.u32 %v32, 4294901760
  %1080 = vmatpush1.msra.mxu0 %v1079
  %1081 = vmatprep.subr.mxu0 0.0
  %v1082 = vand.u32 %v33, 4294901760
  %1083 = vmatpush1.msra.mxu0 %v1082
  %1084 = vmatprep.subr.mxu0 0.0
  %v1085 = vand.u32 %v93, 4294901760
  %1086 = vmatpush1.msra.mxu0 %v1085
  %1087 = vmatprep.subr.mxu0 0.0
  %1088 = vmatpush1.msra.mxu0 0.0
  %1089 = vmatprep.subr.mxu0 0.0
  %1090 = vmatpush1.msra.mxu0 0.0
  %1091 = vmatprep.subr.mxu0 0.0
  %1092 = vmatpush1.msra.mxu0 0.0
  %1093 = vmatprep.subr.mxu0 0.0
  %1094 = vmatpush1.msra.mxu0 0.0
  %1095 = vmatprep.subr.mxu0 0.0
  %1096 = vmatpush1.msra.mxu0 0.0
  %1097 = vmatprep.subr.mxu0 0.0
  %1098 = vmatpush1.msra.mxu0 0.0
  %1099 = vmatprep.subr.mxu0 0.0
  %1100 = vmatpush1.msra.mxu0 0.0
  %1101 = vmatprep.subr.mxu0 0.0
  %1102 = vmatpush1.msra.mxu0 0.0
  %1103 = vmatprep.subr.mxu0 0.0
  %1104 = vmatpush1.msra.mxu0 0.0
  %1105 = vmatprep.subr.mxu0 0.0
  %1106 = vmatpush1.msra.mxu0 0.0
  %1107 = vmatprep.subr.mxu0 0.0
  %1108 = vmatpush1.msra.mxu0 0.0
  %1109 = vmatprep.subr.mxu0 0.0
  %1110 = vmatpush1.msra.mxu0 0.0
  %1111 = vmatprep.subr.mxu0 0.0
  %1112 = vmatpush1.msra.mxu0 0.0
  %1113 = vmatprep.subr.mxu0 0.0
  %1114 = vmatpush1.msra.mxu0 0.0
  %1115 = vmatprep.subr.mxu0 0.0
  %1116 = vmatpush1.msra.mxu0 0.0
  %1117 = vmatprep.subr.mxu0 0.0
  %1118 = vmatpush1.msra.mxu0 0.0
  %1119 = vmatprep.subr.mxu0 0.0
  %1120 = vmatpush1.msra.mxu0 0.0
  %1121 = vmatprep.subr.mxu0 0.0
  %1122 = vmatpush1.msra.mxu0 0.0
  %1123 = vmatprep.subr.mxu0 0.0
  %1124 = vmatpush1.msra.mxu0 0.0
  %1125 = vmatprep.subr.mxu0 0.0
  %1126 = vmatpush1.msra.mxu0 0.0
  %1127 = vmatprep.subr.mxu0 0.0
  %1128 = vmatpush1.msra.mxu0 0.0
  %1129 = vmatprep.subr.mxu0 0.0
  %1130 = vmatpush1.msra.mxu0 0.0
  %1131 = vmatprep.subr.mxu0 0.0
  %1132 = vmatpush1.msra.mxu0 0.0
  %1133 = vmatprep.subr.mxu0 0.0
  %1134 = vmatpush1.msra.mxu0 0.0
  %1135 = vmatprep.subr.mxu0 0.0
  %1136 = vmatpush1.msra.mxu0 0.0
  %1137 = vmatprep.subr.mxu0 0.0
  %1138 = vmatpush1.msra.mxu0 0.0
  %1139 = vmatprep.subr.mxu0 0.0
  %1140 = vmatpush1.msra.mxu0 0.0
  %1141 = vmatprep.mubr.f32.mxu0 0.0
  %v1142 = vand.u32 %v44, 4294901760
  %1143 = vmatmul.mubr.f32.gmra.mrb[0].mxu0 %v1142
  %v1144 = vpop.f32.mrb[0].mxu0
  %v1145 = vadd.f32 %v979, %v1144
  %v1146 = vpop.f32.mrb[0].mxu0
  %1147 = vmatprep.mubr.f32.mxu0 0.0
  %v1148 = vand.u32 %v47, 4294901760
  %1149 = vmatmul.mubr.f32.gmra.mrb[0].mxu0 %v1148
  %v1150 = vpop.f32.mrb[0].mxu0
  %v1151 = vadd.f32 %v985, %v1150
  %v1152 = vpop.f32.mrb[0].mxu0
  %1153 = vmatprep.mubr.f32.mxu0 0.0
  %v1154 = vand.u32 %v50, 4294901760
  %1155 = vmatmul.mubr.f32.gmra.mrb[0].mxu0 %v1154
  %v1156 = vpop.f32.mrb[0].mxu0
  %v1157 = vadd.f32 %v991, %v1156
  %v1158 = vpop.f32.mrb[0].mxu0
  %1159 = vmatprep.mubr.f32.mxu0 0.0
  %v1160 = vand.u32 %v53, 4294901760
  %1161 = vmatmul.mubr.f32.gmra.mrb[0].mxu0 %v1160
  %v1162 = vpop.f32.mrb[0].mxu0
  %v1163 = vadd.f32 %v997, %v1162
  %v1164 = vpop.f32.mrb[0].mxu0
  %1165 = vmatprep.mubr.f32.mxu0 0.0
  %v1166 = vand.u32 %v56, 4294901760
  %1167 = vmatmul.mubr.f32.gmra.mrb[0].mxu0 %v1166
  %v1168 = vpop.f32.mrb[0].mxu0
  %v1169 = vadd.f32 %v1003, %v1168
  %v1170 = vpop.f32.mrb[0].mxu0
  %1171 = vmatprep.mubr.f32.mxu0 0.0
  %v1172 = vand.u32 %v59, 4294901760
  %1173 = vmatmul.mubr.f32.gmra.mrb[0].mxu0 %v1172
  %v1174 = vpop.f32.mrb[0].mxu0
  %v1175 = vadd.f32 %v1009, %v1174
  %v1176 = vpop.f32.mrb[0].mxu0
  %1177 = vmatprep.mubr.f32.mxu0 0.0
  %v1178 = vand.u32 %v62, 4294901760
  %1179 = vmatmul.mubr.f32.gmra.mrb[0].mxu0 %v1178
  %v1180 = vpop.f32.mrb[0].mxu0
  %v1181 = vadd.f32 %v1015, %v1180
  %v1182 = vpop.f32.mrb[0].mxu0
  %1183 = vmatprep.mubr.f32.mxu0 0.0
  %v1184 = vand.u32 %v65, 4294901760
  %1185 = vmatmul.mubr.f32.gmra.mrb[0].mxu0 %v1184
  %v1186 = vpop.f32.mrb[0].mxu0
  %v1187 = vadd.f32 %v1021, %v1186
  %v1188 = vpop.f32.mrb[0].mxu0
  %1189 = vmatprep.mubr.f32.mxu0 0.0
  %v1190 = vand.u32 %v68, 4294901760
  %1191 = vmatmul.mubr.f32.gmra.mrb[0].mxu0 %v1190
  %v1192 = vpop.f32.mrb[0].mxu0
  %v1193 = vadd.f32 %v1027, %v1192
  %v1194 = vpop.f32.mrb[0].mxu0
  %1195 = vmatprep.mubr.f32.mxu0 0.0
  %v1196 = vand.u32 %v71, 4294901760
  %1197 = vmatmul.mubr.f32.gmra.mrb[0].mxu0 %v1196
  %v1198 = vpop.f32.mrb[0].mxu0
  %v1199 = vadd.f32 %v1033, %v1198
  %v1200 = vpop.f32.mrb[0].mxu0
  %1201 = vmatprep.mubr.f32.mxu0 0.0
  %v1202 = vand.u32 %v74, 4294901760
  %1203 = vmatmul.mubr.f32.gmra.mrb[0].mxu0 %v1202
  %v1204 = vpop.f32.mrb[0].mxu0
  %v1205 = vadd.f32 %v1039, %v1204
  %v1206 = vpop.f32.mrb[0].mxu0
  %1207 = vmatprep.mubr.f32.mxu0 0.0
  %v1208 = vand.u32 %v77, 4294901760
  %1209 = vmatmul.mubr.f32.gmra.mrb[0].mxu0 %v1208
  %v1210 = vpop.f32.mrb[0].mxu0
  %v1211 = vadd.f32 %v1045, %v1210
  %v1212 = vpop.f32.mrb[0].mxu0
  %1213 = vmatprep.mubr.f32.mxu0 0.0
  %v1214 = vand.u32 %v80, 4294901760
  %1215 = vmatmul.mubr.f32.gmra.mrb[0].mxu0 %v1214
  %v1216 = vpop.f32.mrb[0].mxu0
  %v1217 = vadd.f32 %v1051, %v1216
  %v1218 = vpop.f32.mrb[0].mxu0
  %1219 = vmatprep.mubr.f32.mxu0 0.0
  %v1220 = vand.u32 %v83, 4294901760
  %1221 = vmatmul.mubr.f32.gmra.mrb[0].mxu0 %v1220
  %v1222 = vpop.f32.mrb[0].mxu0
  %v1223 = vadd.f32 %v1057, %v1222
  %v1224 = vpop.f32.mrb[0].mxu0
  %1225 = vmatprep.mubr.f32.mxu0 0.0
  %v1226 = vand.u32 %v86, 4294901760
  %1227 = vmatmul.mubr.f32.gmra.mrb[0].mxu0 %v1226
  %v1228 = vpop.f32.mrb[0].mxu0
  %v1229 = vadd.f32 %v1063, %v1228
  %v1230 = vpop.f32.mrb[0].mxu0
  %1231 = vmatprep.mubr.f32.mxu0 0.0
  %v1232 = vand.u32 %v89, 4294901760
  %1233 = vmatmul.mubr.f32.gmra.mrb[0].mxu0 %v1232
  %v1234 = vpop.f32.mrb[0].mxu0
  %v1235 = vadd.f32 %v1069, %v1234
  %v1236 = vpop.f32.mrb[0].mxu0
  %1237 = vdwg.mxu0
  %vm1238 = vcmp.gt.f32.partialorder %v1145, 0.0
  %vm1239 = vcmp.gt.f32.partialorder %v1151, 0.0
  %vm1240 = vcmp.gt.f32.partialorder %v1157, 0.0
  %vm1241 = vcmp.gt.f32.partialorder %v1163, 0.0
  %vm1242 = vcmp.gt.f32.partialorder %v1169, 0.0
  %vm1243 = vcmp.gt.f32.partialorder %v1175, 0.0
  %vm1244 = vcmp.gt.f32.partialorder %v1181, 0.0
  %vm1245 = vcmp.gt.f32.partialorder %v1187, 0.0
  %vm1246 = vcmp.gt.f32.partialorder %v1193, 0.0
  %vm1247 = vcmp.gt.f32.partialorder %v1199, 0.0
  %vm1248 = vcmp.gt.f32.partialorder %v1205, 0.0
  %vm1249 = vcmp.gt.f32.partialorder %v1211, 0.0
  %vm1250 = vcmp.gt.f32.partialorder %v1217, 0.0
  %vm1251 = vcmp.gt.f32.partialorder %v1223, 0.0
  %vm1252 = vcmp.gt.f32.partialorder %v1229, 0.0
  %vm1253 = vcmp.gt.f32.partialorder %v1235, 0.0
  %v1254 = vmul.f32 %v1145, 0.01
  %v1255 = vmul.f32 %v1151, 0.01
  %v1256 = vmul.f32 %v1157, 0.01
  %v1257 = vmul.f32 %v1163, 0.01
  %v1258 = vmul.f32 %v1169, 0.01
  %v1259 = vmul.f32 %v1175, 0.01
  %v1260 = vmul.f32 %v1181, 0.01
  %v1261 = vmul.f32 %v1187, 0.01
  %v1262 = vmul.f32 %v1193, 0.01
  %v1263 = vmul.f32 %v1199, 0.01
  %v1264 = vmul.f32 %v1205, 0.01
  %v1265 = vmul.f32 %v1211, 0.01
  %v1266 = vmul.f32 %v1217, 0.01
  %v1267 = vmul.f32 %v1223, 0.01
  %v1268 = vmul.f32 %v1229, 0.01
  %v1269 = vmul.f32 %v1235, 0.01
  %v1270 = vsel %vm1238, %v1145, %v1254
  %v1271 = vsel %vm1239, %v1151, %v1255
  %v1272 = vsel %vm1240, %v1157, %v1256
  %v1273 = vsel %vm1241, %v1163, %v1257
  %v1274 = vsel %vm1242, %v1169, %v1258
  %v1275 = vsel %vm1243, %v1175, %v1259
  %v1276 = vsel %vm1244, %v1181, %v1260
  %v1277 = vsel %vm1245, %v1187, %v1261
  %v1278 = vsel %vm1246, %v1193, %v1262
  %v1279 = vsel %vm1247, %v1199, %v1263
  %v1280 = vsel %vm1248, %v1205, %v1264
  %v1281 = vsel %vm1249, %v1211, %v1265
  %v1282 = vsel %vm1250, %v1217, %v1266
  %v1283 = vsel %vm1251, %v1223, %v1267
  %v1284 = vsel %vm1252, %v1229, %v1268
  %v1285 = vsel %vm1253, %v1235, %v1269
  %vm1286 = vcmask 31744
  %1287 = vst.msk [vmem:[%s3] sm:$0xff] %vm1286, %v1270
  %1288 = vst.msk [vmem:[%s3 + $0x8] sm:$0xff] %vm1286, %v1271
  %1289 = vst.msk [vmem:[%s3 + $0x10] sm:$0xff] %vm1286, %v1272
  %1290 = vst.msk [vmem:[%s3 + $0x18] sm:$0xff] %vm1286, %v1273
  %1291 = vst.msk [vmem:[%s3 + $0x20] sm:$0xff] %vm1286, %v1274
  %1292 = vst.msk [vmem:[%s3 + $0x28] sm:$0xff] %vm1286, %v1275
  %1293 = vst.msk [vmem:[%s3 + $0x30] sm:$0xff] %vm1286, %v1276
  %1294 = vst.msk [vmem:[%s3 + $0x38] sm:$0xff] %vm1286, %v1277
  %1295 = vst.msk [vmem:[%s3 + $0x40] sm:$0xff] %vm1286, %v1278
  %1296 = vst.msk [vmem:[%s3 + $0x48] sm:$0xff] %vm1286, %v1279
  %1297 = vst.msk [vmem:[%s3 + $0x50] sm:$0xff] %vm1286, %v1280
  %1298 = vst.msk [vmem:[%s3 + $0x58] sm:$0xff] %vm1286, %v1281
  %1299 = vst.msk [vmem:[%s3 + $0x60] sm:$0xff] %vm1286, %v1282
  %1300 = vst.msk [vmem:[%s3 + $0x68] sm:$0xff] %vm1286, %v1283
  %1301 = vst.msk [vmem:[%s3 + $0x70] sm:$0xff] %vm1286, %v1284
  %1302 = vst.msk [vmem:[%s3 + $0x78] sm:$0xff] %vm1286, %v1285
  // Predicated region
  $region14: #{downsampling.1} parent=0 // pred_check
    _
  $region15: #{downsampling.1} parent=0 // pred_check_branch
    %1304 = sbr.rel (0) target = $region17
  $region16: #{downsampling.1} parent=0 // pred_region
    _
  $region17: #{downsampling.1} parent=0 // pred_fallthru
    _
  // Predicated region
  $region18: #{downsampling.1} parent=0 // pred_check
    _
  $region19: #{downsampling.1} parent=0 // pred_check_branch
    %1306 = sbr.rel (0) target = $region21
  $region20: #{downsampling.1} parent=0 // pred_region
    _
  $region21: #{downsampling.1} parent=0 // pred_fallthru
    _

</llo_original>
